<compile_context>
chip_gen: v6e
topology: v6e:2x2x1
jax: 0.10.0
libtpu: 0.0.40
codegen_flags: <defaults>
</compile_context>

<pallas_src>
import functools

import jax
import jax.numpy as jnp
from jax.experimental import pallas as pl
from jax.experimental.pallas import tpu as pltpu


def _unit_layernorm_kernel(x_ref, w_ref, o_ref, *, eps, inv_d):
    # x_ref: (row_tile, D) tile of independent rows; w_ref: (1, D).
    x = x_ref[...].astype(jnp.float32)
    # Fused statistics: both cross-lane reductions issue back-to-back on the XLU.
    s1 = jnp.sum(x, axis=-1, keepdims=True)
    s2 = jnp.sum(x * x, axis=-1, keepdims=True)
    mean = s1 * inv_d
    var = jnp.maximum(s2 * inv_d - mean * mean, 0.0)  # clamp tiny negative rounding
    inv = jax.lax.rsqrt(var + eps)                    # EUP
    w = w_ref[...].astype(jnp.float32)                # (1, D) broadcasts over rows
    # Module's bias is a registered zeros buffer (never trained) -> elided.
    o_ref[...] = ((x - mean) * inv * w).astype(o_ref.dtype)


def _choose_row_tile(n_rows, d, itemsize, *,
                     target_block_bytes=4 << 20, min_grid_steps=8):
    """Largest multiple-of-8 row tile whose (rows, D) block fits the per-block
    VMEM budget, while keeping >= ~min_grid_steps grid steps for pipelining and
    the v7x 2-TensorCore split."""
    if n_rows < 8:
        return n_rows  # block dim equal to full array dim satisfies tiling rules
    bytes_per_row = max(1, d * itemsize)
    t = max(8, target_block_bytes // bytes_per_row)
    t = min(t, max(8, n_rows // min_grid_steps))
    t = max(8, (t // 8) * 8)                    # sublane (8) granularity
    t = min(t, ((n_rows + 7) // 8) * 8)         # no point exceeding total rows
    return int(t)


def unit_layer_norm(x, weight, *, eps=1e-5, row_tile=None):
    """LayerNorm over the last axis of x (UnitLayerNorm forward).

    x: (..., D); weight: (D,). The module's bias is a zeros buffer, so the
    affine part reduces to `xhat * weight`.
    """
    orig_shape = x.shape
    D = orig_shape[-1]
    assert weight.shape == (D,)

    x2 = x.reshape(-1, D)
    R = x2.shape[0]
    if row_tile is None:
        row_tile = _choose_row_tile(R, D, jnp.dtype(x.dtype).itemsize)

    w2 = weight.reshape(1, D)
    grid = (pl.cdiv(R, row_tile),)  # last block may be partial: reads padded rows,
                                    # out-of-range writes are clipped (rows independent)

    # TODO(synk): if production D < 128, pack 128/D rows per lane group (wrapper
    # reshape + segmented pltpu.roll add-tree) for lane-dense stores; the simple
    # (row_tile, D) layout below is correct for any D but lane-sparse when D < 128.
    out = pl.pallas_call(
        functools.partial(_unit_layernorm_kernel, eps=eps, inv_d=1.0 / D),
        out_shape=jax.ShapeDtypeStruct((R, D), x.dtype),
        grid_spec=pltpu.PrefetchScalarGridSpec(
            num_scalar_prefetch=0,
            grid=grid,
            in_specs=[
                pl.BlockSpec((row_tile, D), lambda i: (i, 0)),
                pl.BlockSpec((1, D), lambda i: (0, 0)),
            ],
            out_specs=pl.BlockSpec((row_tile, D), lambda i: (i, 0)),
        ),
        compiler_params=pltpu.CompilerParams(
            dimension_semantics=("parallel",),
            # Above the 32 MiB scoped default (v5e/v6e), with headroom under
            # v7x's 64 MiB physical VMEM. Blocks are ~4 MiB so 2x in + 2x out
            # double buffers stay well inside this.
            vmem_limit_bytes=48 << 20,
        ),
    )(x2, w2)

    return out.reshape(orig_shape)


if __name__ == "__main__":
    key = jax.random.PRNGKey(0)

    def ref(x, w, eps=1e-5):
        mean = jnp.mean(x, axis=-1, keepdims=True)
        var = jnp.mean((x - mean) ** 2, axis=-1, keepdims=True)
        return (x - mean) / jnp.sqrt(var + eps) * w  # bias buffer is zeros

    k1, k2 = jax.random.split(key)

    # Case 1: small shape matching the module test (B, S, D); weight = ones init.
    B, S, D = 2, 8, 32
    x = jax.random.normal(k1, (B, S, D), dtype=jnp.float32)
    w = jnp.ones((D,), dtype=jnp.float32)
    y = jax.block_until_ready(unit_layer_norm(x, w, eps=1e-5))
    assert jnp.max(jnp.abs(y - ref(x, w))) < 1e-4, "mismatch vs reference (case 1)"

    # Case 2: lane-dense D and a row count not divisible by the row tile,
    # exercising the cdiv partial-block path and a non-trivial weight.
    B2, S2, D2 = 3, 5, 256
    x2 = jax.random.normal(k2, (B2, S2, D2), dtype=jnp.float32)
    w2 = 0.5 * jnp.ones((D2,), dtype=jnp.float32)
    y2 = jax.block_until_ready(unit_layer_norm(x2, w2, eps=1e-5))
    assert jnp.max(jnp.abs(y2 - ref(x2, w2))) < 1e-4, "mismatch vs reference (case 2)"

    print("KERNEL_OK")
</pallas_src>

<mosaic_0001>
module attributes {stable_mosaic.version = 11 : i64} {
  func.func @_unit_layernorm_kernel(%arg0: i32, %arg1: memref<8x32xf32, #tpu.memory_space<vmem>>, %arg2: memref<1x32xf32, #tpu.memory_space<vmem>>, %arg3: memref<8x32xf32, #tpu.memory_space<vmem>>) attributes {dimension_semantics = [#tpu.dimension_semantics<parallel>], iteration_bounds = array<i64: 2>, scalar_prefetch = 0 : i64, scratch_operands = 0 : i64, tpu.core_type = #tpu.core_type<tc>, window_params = [{transform_indices = @transform_0, window_bounds = array<i64: 8, 32>}, {pipeline_mode = #tpu.pipeline_mode<synchronous>, transform_indices = @transform_1, window_bounds = array<i64: 1, 32>}, {transform_indices = @transform_2, window_bounds = array<i64: 8, 32>}]} {
    %c0 = arith.constant 0 : index
    %c0_0 = arith.constant 0 : index
    %0 = vector.load %arg1[%c0, %c0_0] : memref<8x32xf32, #tpu.memory_space<vmem>>, vector<8x32xf32>
    %cst = arith.constant dense<0.000000e+00> : vector<8xf32>
    %1 = vector.multi_reduction <add>, %0, %cst [1] : vector<8x32xf32> to vector<8xf32>
    %2 = vector.shape_cast %1 : vector<8xf32> to vector<8x1xf32>
    %3 = arith.mulf %0, %0 : vector<8x32xf32>
    %cst_1 = arith.constant dense<0.000000e+00> : vector<8xf32>
    %4 = vector.multi_reduction <add>, %3, %cst_1 [1] : vector<8x32xf32> to vector<8xf32>
    %5 = vector.shape_cast %4 : vector<8xf32> to vector<8x1xf32>
    %cst_2 = arith.constant 3.125000e-02 : f32
    %6 = vector.broadcast %cst_2 : f32 to vector<8x1xf32>
    %7 = arith.mulf %2, %6 : vector<8x1xf32>
    %cst_3 = arith.constant 3.125000e-02 : f32
    %8 = vector.broadcast %cst_3 : f32 to vector<8x1xf32>
    %9 = arith.mulf %5, %8 : vector<8x1xf32>
    %10 = arith.mulf %7, %7 : vector<8x1xf32>
    %11 = arith.subf %9, %10 : vector<8x1xf32>
    %cst_4 = arith.constant 0.000000e+00 : f32
    %12 = vector.broadcast %cst_4 : f32 to vector<8x1xf32>
    %13 = arith.maximumf %11, %12 : vector<8x1xf32>
    %cst_5 = arith.constant 9.99999974E-6 : f32
    %14 = vector.broadcast %cst_5 : f32 to vector<8x1xf32>
    %15 = arith.addf %13, %14 : vector<8x1xf32>
    %16 = math.rsqrt %15 : vector<8x1xf32>
    %c0_6 = arith.constant 0 : index
    %c0_7 = arith.constant 0 : index
    %17 = vector.load %arg2[%c0_6, %c0_7] : memref<1x32xf32, #tpu.memory_space<vmem>>, vector<1x32xf32>
    %18 = vector.broadcast %7 : vector<8x1xf32> to vector<8x32xf32>
    %19 = arith.subf %0, %18 : vector<8x32xf32>
    %20 = vector.broadcast %16 : vector<8x1xf32> to vector<8x32xf32>
    %21 = arith.mulf %19, %20 : vector<8x32xf32>
    %22 = vector.broadcast %17 : vector<1x32xf32> to vector<8x32xf32>
    %23 = arith.mulf %21, %22 : vector<8x32xf32>
    %c0_8 = arith.constant 0 : index
    %c0_9 = arith.constant 0 : index
    %24 = vector.load %arg3[%c0_8, %c0_9] : memref<8x32xf32, #tpu.memory_space<vmem>>, vector<8x32xf32>
    tpu.vector_store %arg3[%c0_8, %c0_9], %23 {strides = array<i32>} : memref<8x32xf32, #tpu.memory_space<vmem>>, vector<8x32xf32>,
    return
  }
  func.func @transform_0(%arg0: i32) -> (i32, i32) {
    %c0_i32 = arith.constant 0 : i32
    %c0_i32_0 = arith.constant 0 : i32
    return %arg0, %c0_i32 : i32, i32
  }
  func.func @transform_1(%arg0: i32) -> (i32, i32) {
    %c0_i32 = arith.constant 0 : i32
    %c0_i32_0 = arith.constant 0 : i32
    %c0_i32_1 = arith.constant 0 : i32
    return %c0_i32, %c0_i32_0 : i32, i32
  }
  func.func @transform_2(%arg0: i32) -> (i32, i32) {
    %c0_i32 = arith.constant 0 : i32
    %c0_i32_0 = arith.constant 0 : i32
    return %arg0, %c0_i32 : i32, i32
  }
}

</mosaic_0001>

<llo_original>
// kernel: tpu_custom_call.1
$region0: #{tpu_custom_call.1}
  #allocation0 [shape = 'u32[]', space=smem, size = 0x4, offset = 0x4, fixed_abs, tag = 'smem constant byte address 0x4 - core index']
  #allocation1 [shape = 'u32[144,128]{1,0:T(1,128)}', space=vmem, size = 0x12000, scoped, tag = 'internal scratch']
  %s0 = inlined_call_operand.hbm [shape: f32[16,32], index: 0, kind: input, shape index: {}]
  %s1 = inlined_call_operand.vmem [shape: f32[1,32], index: 1, kind: input, shape index: {}]
  %s2 = inlined_call_operand.hbm [shape: f32[16,32], index: 2, kind: output, shape index: {}]
  %s3 = sld [smem:[#allocation0]]
  $region45: #{tpu_custom_call.1} parent=0
    _
  %s5 = ssub.s32 1, %s3
  %s6 = scalar_select 0, %s5, %s3
  $region1: #{tpu_custom_call.1} parent=0
    #allocation2 [shape = 'u8[8192]{0}', space=vmem, size = 0x2000, scoped, tag = 'input window, operand 0']
    #allocation3 [shape = 's32[2]{0}', space=sflag, size = 0x8, scoped, tag = 'scoped memory for tpu_custom_call.1']
    #allocation4 [shape = 's32[2]{0}', space=sflag, size = 0x8, scoped, tag = 'scoped memory for tpu_custom_call.1']
    #allocation5 [shape = 'u8[8192]{0}', space=vmem, size = 0x2000, scoped, tag = 'output window, operand 0']
    %7 = vsyncpa [#allocation3], 0
    %s8 = scalar_lea.sflag [#allocation3], 1
    %9 = vsyncpa %s8, 0
    %10 = vsyncpa [#allocation4], 0
    %s11 = scalar_lea.sflag [#allocation4], 1
    %12 = vsyncpa %s11, 0
    loop: start=0, step=1, limit=4
    $region2: #{tpu_custom_call.1} parent=1 // loop_pre_header
      _
    $region3: #{tpu_custom_call.1} parent=1 // loop_header
      %s14 = sphi 0, %s18
      %p15 = scmp.ge.s32.totalorder %s14, 4
      %s24 = sphi 0, %s26
      %s27 = sphi 0, %s24
      %s28 = sphi 0, %s27
      %s44 = sphi 0, %s28
      %s48 = sphi 0, %s48
      %s50 = sphi 0, %s48
      %s51 = sphi 0, %s50
      %s65 = sphi 0, %s51
      %s71 = sphi 0, %s73
      %s74 = sphi 0, %s71
      %s75 = sphi 0, %s74
      %s91 = sphi 0, %s75
    $region4: #{tpu_custom_call.1} parent=1 // loop_header_branch
      %17 = sbr.rel (%p15) target = $region8
    $region5: #{tpu_custom_call.1} parent=1 // loop_body
      %s19 = ssub.s32 %s14, 1
      %s20 = ssub.s32 %s14, 2
      %s21 = sadd.s32 %s14, 1
      %s22 = ssub.s32 %s14, %s21
      %p23 = scmp.eq.s32.totalorder %s22, 0
      %s25 = sadd.s32 %s24, 1
      %s26 = scalar_select %p23, %s24, %s25
      %p29 = pneg %p23
      %p30 = scmp.eq.s32.totalorder %s14, 1
      %p31 = por %p29, %p30
      %p32 = scmp.ne.s32.totalorder %s24, %s27
      %p33 = scmp.eq.s32.totalorder %s14, 0
      %p34 = por %p32, %p33
      %p35 = scmp.ne.s32.totalorder %s24, %s27
      %p36 = scmp.eq.s32.totalorder %s19, 1
      %p37 = por %p35, %p36
      %p38 = scmp.ne.s32.totalorder %s27, %s28
      %p39 = scmp.eq.s32.totalorder %s19, 0
      %p40 = por %p38, %p39
      %p41 = scmp.ne.s32.totalorder %s27, %s28
      %p42 = scmp.eq.s32.totalorder %s20, 1
      %p43 = por %p41, %p42
      %p45 = scmp.ne.s32.totalorder %s28, %s44
      %p46 = scmp.eq.s32.totalorder %s20, 0
      %p47 = por %p45, %p46
      %s49 = sadd.s32 %s48, 1
      %p52 = scmp.eq.s32.totalorder %s14, 1
      %p53 = scmp.ne.s32.totalorder %s48, %s50
      %p54 = scmp.eq.s32.totalorder %s14, 0
      %p55 = por %p53, %p54
      %p56 = scmp.ne.s32.totalorder %s48, %s50
      %p57 = scmp.eq.s32.totalorder %s19, 1
      %p58 = por %p56, %p57
      %p59 = scmp.ne.s32.totalorder %s50, %s51
      %p60 = scmp.eq.s32.totalorder %s19, 0
      %p61 = por %p59, %p60
      %p62 = scmp.ne.s32.totalorder %s50, %s51
      %p63 = scmp.eq.s32.totalorder %s20, 1
      %p64 = por %p62, %p63
      %p66 = scmp.ne.s32.totalorder %s51, %s65
      %p67 = scmp.eq.s32.totalorder %s20, 0
      %p68 = por %p66, %p67
      %s69 = ssub.s32 %s14, %s21
      %p70 = scmp.eq.s32.totalorder %s69, 0
      %s72 = sadd.s32 %s71, 1
      %s73 = scalar_select %p70, %s71, %s72
      %p76 = pneg %p70
      %p77 = scmp.eq.s32.totalorder %s14, 1
      %p78 = por %p76, %p77
      %p79 = scmp.ne.s32.totalorder %s71, %s74
      %p80 = scmp.eq.s32.totalorder %s14, 0
      %p81 = por %p79, %p80
      %p82 = scmp.ne.s32.totalorder %s71, %s74
      %p83 = scmp.eq.s32.totalorder %s19, 1
      %p84 = por %p82, %p83
      %p85 = scmp.ne.s32.totalorder %s74, %s75
      %p86 = scmp.eq.s32.totalorder %s19, 0
      %p87 = por %p85, %p86
      %p88 = scmp.ne.s32.totalorder %s74, %s75
      %p89 = scmp.eq.s32.totalorder %s20, 1
      %p90 = por %p88, %p89
      %p92 = scmp.ne.s32.totalorder %s75, %s91
      %p93 = scmp.eq.s32.totalorder %s20, 0
      %p94 = por %p92, %p93
      %p95 = scmp.le.s32.totalorder 1, %s14
      %p96 = scmp.lt.s32.totalorder %s14, 3
      %p97 = pnand %p95, %p96
      %p98 = pneg %p97
      // Predicated region
      $region9: #{tpu_custom_call.1} parent=5 // pred_check
        _
      $region10: #{tpu_custom_call.1} parent=5 // pred_check_branch
        %100 = sbr.rel (%p97) target = $region12
      $region11: #{tpu_custom_call.1} parent=5 // pred_region
        %s101 = ssub.s32 %s14, 1
        // Predicated region
        $region13: #{tpu_custom_call.1} parent=11 // pred_check
          %p102 = pneg %p61
        $region14: #{tpu_custom_call.1} parent=11 // pred_check_branch
          %104 = sbr.rel (%p102) target = $region16
        $region15: #{tpu_custom_call.1} parent=11 // pred_region
          _
        $region16: #{tpu_custom_call.1} parent=11 // pred_fallthru
          _
      $region12: #{tpu_custom_call.1} parent=5 // pred_fallthru
        _
      %p105 = scmp.lt.s32.totalorder %s14, 2
      // Predicated region
      $region17: #{tpu_custom_call.1} parent=5 // pred_check
        %p106 = pneg %p105
      $region18: #{tpu_custom_call.1} parent=5 // pred_check_branch
        %108 = sbr.rel (%p106) target = $region20
      $region19: #{tpu_custom_call.1} parent=5 // pred_region
        // Predicated region
        $region21: #{tpu_custom_call.1} parent=19 // pred_check
          %p109 = pneg %p34
        $region22: #{tpu_custom_call.1} parent=19 // pred_check_branch
          %111 = sbr.rel (%p109) target = $region24
        $region23: #{tpu_custom_call.1} parent=19 // pred_region
          %s112 = sand.u32 %s24, 1
          %s113 = scalar_lea.sflag [#allocation3], %s112
          %s114 = sand.u32 %s24, 1
          %s115 = smul.addr %s114, 8
          %s116 = scalar_lea.vmem [#allocation2], %s115
          %s118 = ssub.s32 128, 128
          %119 = vsyncadd %s113, %s118
          %s120 = smul.addr %s14, 128
          %s121 = scalar_lea.hbm %s0, %s120
          %s123 = sshll.u32 %s116, 4
          %s124 = int_to_ptr.vmem [resolvable:$true] %s123
          %126 = dma.hbm_to_vmem [thread:$0]  %s121, 128, %s124, %s113
        $region24: #{tpu_custom_call.1} parent=19 // pred_fallthru
          _
      $region20: #{tpu_custom_call.1} parent=5 // pred_fallthru
        _
      %p127 = scmp.le.s32.totalorder 1, %s14
      %p128 = scmp.lt.s32.totalorder %s14, 3
      %p129 = pnand %p127, %p128
      %p130 = pneg %p129
      // Predicated region
      $region25: #{tpu_custom_call.1} parent=5 // pred_check
        _
      $region26: #{tpu_custom_call.1} parent=5 // pred_check_branch
        %132 = sbr.rel (%p129) target = $region28
      $region27: #{tpu_custom_call.1} parent=5 // pred_region
        %s133 = ssub.s32 %s14, 1
        %s134 = sand.u32 %s27, 1
        %s135 = scalar_lea.sflag [#allocation3], %s134
        %s136 = sand.u32 %s27, 1
        %s137 = smul.addr %s136, 8
        %s138 = scalar_lea.vmem [#allocation2], %s137
        // Predicated region
        $region29: #{tpu_custom_call.1} parent=27 // pred_check
          %p139 = pneg %p40
        $region30: #{tpu_custom_call.1} parent=27 // pred_check_branch
          %141 = sbr.rel (%p139) target = $region32
        $region31: #{tpu_custom_call.1} parent=27 // pred_region
          %142 = dma.done %s135, 128
        $region32: #{tpu_custom_call.1} parent=27 // pred_fallthru
          _
        %s143 = sand.u32 %s27, 1
        %s144 = scalar_lea.sflag [#allocation3], %s143
        %s145 = sand.u32 %s27, 1
        %s146 = smul.addr %s145, 8
        %s147 = scalar_lea.vmem [#allocation2], %s146
        %p148 = pneg %p40
        %p149 = pneg %p37
        %p150 = pneg %p61
        %p151 = pneg %p58
        %p152 = pneg %p87
        %p153 = pneg %p84
        %s154 = sand.u32 %s74, 1
        %s155 = scalar_lea.sflag [#allocation4], %s154
        %s156 = sand.u32 %s74, 1
        %s157 = smul.addr %s156, 8
        %s158 = scalar_lea.vmem [#allocation5], %s157
        %v159 = vld [vmem:[%s138] sm:$0xff]
        %vm160 = vcmask 261120
        %v161 = vsel %vm160, %v159, 0.0
        %162 = vadd.xlane.f32.xlu0 %v161
        %v163 = vpop.xlane.xlu0 %162
        %v164 = vmul.f32 %v159, %v159
        %v165 = vsel %vm160, %v164, 0.0
        %166 = vadd.xlane.f32.xlu0 %v165
        %v167 = vpop.xlane.xlu0 %166
        %v168 = vmul.f32 %v163, 0.03125
        %v169 = vmul.f32 %v167, 0.03125
        %v170 = vmul.f32 %v168, %v168
        %v171 = vsub.f32 %v169, %v170
        %v172 = vmax.f32 %v171, 0.0
        %v173 = vadd.f32 %v172, 1e-05
        %v174 = vrsqrt.pop %v173
        %v175 = vld [vmem:[%s1] sm:$0x1]
        %v176 = vsub.f32 %v159, %v168
        %v177 = vmul.f32 %v176, %v174
        %v179 = vlaneseq
        %v180 = vshrl.u32 %v179, 7
        %v181 = vsub.s32 0, %v180
        %v182 = vrot.slane %v175, %v181
        %v184 = vmul.f32 %v177, %v182
        %185 = vst.msk [vmem:[%s158] sm:$0xff] %vm160, %v184
        %s186 = sand.u32 %s74, 1
        %s187 = scalar_lea.sflag [#allocation4], %s186
        %s188 = sand.u32 %s74, 1
        %s189 = smul.addr %s188, 8
        %s190 = scalar_lea.vmem [#allocation5], %s189
        // Predicated region
        $region33: #{tpu_custom_call.1} parent=27 // pred_check
          %p191 = pneg %p84
        $region34: #{tpu_custom_call.1} parent=27 // pred_check_branch
          %193 = sbr.rel (%p191) target = $region36
        $region35: #{tpu_custom_call.1} parent=27 // pred_region
          %s195 = ssub.s32 128, 128
          %196 = vsyncadd %s187, %s195
          %s197 = smul.addr %s19, 128
          %s198 = scalar_lea.hbm %s2, %s197
          %s200 = sshll.u32 %s190, 4
          %s201 = int_to_ptr.vmem [resolvable:$true] %s200
          %203 = dma.vmem_to_hbm [thread:$0]  %s201, 128, %s198, %s187
        $region36: #{tpu_custom_call.1} parent=27 // pred_fallthru
          _
      $region28: #{tpu_custom_call.1} parent=5 // pred_fallthru
        _
      %p204 = scmp.le.s32.totalorder 2, %s14
      // Predicated region
      $region37: #{tpu_custom_call.1} parent=5 // pred_check
        %p205 = pneg %p204
      $region38: #{tpu_custom_call.1} parent=5 // pred_check_branch
        %207 = sbr.rel (%p205) target = $region40
      $region39: #{tpu_custom_call.1} parent=5 // pred_region
        %s208 = ssub.s32 %s14, 2
        // Predicated region
        $region41: #{tpu_custom_call.1} parent=39 // pred_check
          %p209 = pneg %p90
        $region42: #{tpu_custom_call.1} parent=39 // pred_check_branch
          %211 = sbr.rel (%p209) target = $region44
        $region43: #{tpu_custom_call.1} parent=39 // pred_region
          %s212 = sand.u32 %s75, 1
          %s213 = scalar_lea.sflag [#allocation4], %s212
          %s214 = sand.u32 %s75, 1
          %s215 = smul.addr %s214, 8
          %s216 = scalar_lea.vmem [#allocation5], %s215
          %217 = dma.done %s213, 128
        $region44: #{tpu_custom_call.1} parent=39 // pred_fallthru
          _
      $region40: #{tpu_custom_call.1} parent=5 // pred_fallthru
        _
    $region6: #{tpu_custom_call.1} parent=1 // loop_footer
      %s18 = sadd.s32 1, %s14
    $region7: #{tpu_custom_call.1} parent=1 // loop_footer_branch
      %13 = sbr.rel target = $region3
    $region8: #{tpu_custom_call.1} parent=1 // loop_exit
      _
    %218 = vsyncpa [#allocation3], 1
    %s219 = scalar_lea.sflag [#allocation3], 1
    %220 = vsyncpa %s219, 1
    %221 = vsyncpa [#allocation4], 1
    %s222 = scalar_lea.sflag [#allocation4], 1
    %223 = vsyncpa %s222, 1

</llo_original>
